<compile_context>
chip_gen: v6e
topology: v6e:2x2x1
jax: 0.10.0
libtpu: 0.0.40
codegen_flags: <defaults>
</compile_context>

<pallas_src>
import functools
import math

import jax
import jax.numpy as jnp
from jax import lax
from jax.experimental import pallas as pl
from jax.experimental.pallas import tpu as pltpu


def _round_up(x, m):
    return (x + m - 1) // m * m


def _gelu_exact(x):
    # PyTorch nn.GELU() default = exact erf-based GELU (computed in f32).
    return 0.5 * x * (1.0 + lax.erf(x * (1.0 / math.sqrt(2.0))))


def adapter_kernel(h_ref, t_ref, wdh_ref, wdt_ref, bd_ref, wu_ref, bu_ref, o_ref):
    h = h_ref[...]                                             # (tm, Dh_p) io dtype
    t = t_ref[...]                                             # (tm, Dt_p) io dtype
    # Down projection: concat folded into two MXU matmuls, f32 accumulation.
    z = (jnp.dot(h, wdh_ref[...], preferred_element_type=jnp.float32)
         + jnp.dot(t, wdt_ref[...], preferred_element_type=jnp.float32)
         + bd_ref[...])                                        # (tm, H_p) f32
    g = _gelu_exact(z)                                         # f32
    # Up projection (+ bias), then residual add, both accumulated in f32.
    up = (jnp.dot(g.astype(wu_ref.dtype), wu_ref[...],
                  preferred_element_type=jnp.float32)
          + bu_ref[...])                                       # (tm, Dh_p) f32
    o_ref[...] = (h.astype(jnp.float32) + up).astype(o_ref.dtype)


def _pad_lanes(x, cols):
    r, c = x.shape
    if c == cols:
        return x
    return jnp.pad(x, ((0, 0), (0, cols - c)))


def _pad2d(x, rows, cols):
    r, c = x.shape
    if r == rows and c == cols:
        return x
    return jnp.pad(x, ((0, rows - r), (0, cols - c)))


def _vmem_capacity_bytes():
    """Physical per-TensorCore VMEM; conservative v7x default if unknown."""
    try:
        info = pltpu.get_tpu_info()
        cap = getattr(info, "vmem_capacity_bytes", None)
        if cap:
            return int(cap)
    except Exception:
        pass
    return 64 << 20


def _choose_tm(M, tm_cap):
    """Row tile (multiple of 8): >=256 rows when possible (near HBM roofline),
    but always >=2 grid steps for megacore sharding / DMA overlap, and ~4
    steps once M is big enough."""
    tm = _round_up(pl.cdiv(M, 4), 8)            # aim for ~4 grid steps
    tm = min(max(tm, 256), tm_cap)              # ...with tiles of >=256 rows
    if M > 16 and pl.cdiv(M, tm) < 2:           # v7x: never leave a TC idle
        tm = _round_up(pl.cdiv(M, 2), 8)
    return min(tm, _round_up(M, 8))             # never larger than the problem


@functools.partial(jax.jit, static_argnames=("tm_max",))
def adapter_forward(hiddens, tasks, params, *, tm_max=None):
    """hiddens: (B, S, Dh), tasks: (B, S, Dt). Returns (B, S, Dh).

    I/O dtype follows `hiddens`; bf16 is the recommended deployment dtype for
    this HBM-bound op (weights are cast to it inside the wrapper).
    """
    B, S, Dh = hiddens.shape
    Dt = tasks.shape[-1]
    M = B * S

    w_down, b_down, w_up, b_up = params
    Din, H = w_down.shape
    assert Din == Dh + Dt, "W_down input dim must be Dh + Dt"
    assert w_up.shape == (H, Dh), "output_size must equal hidden dim for residual"

    io_dtype = hiddens.dtype
    itemsize = jnp.dtype(io_dtype).itemsize

    # ---- lane (last-dim) padding to multiples of 128 -> unmasked vst / lane-
    #      dense DMAs.  (No row padding: partial last row block is masked by
    #      Pallas, saving an activation-sized HBM round trip for ragged M.)
    Dh_p = _round_up(Dh, 128)
    Dt_p = _round_up(Dt, 128)
    H_p = _round_up(H, 128)

    phys_vmem = _vmem_capacity_bytes()
    tm_cap = tm_max if tm_max is not None else (1024 if phys_vmem >= (100 << 20) else 512)
    tm = _choose_tm(M, tm_cap)
    grid = (pl.cdiv(M, tm),)

    h2 = _pad_lanes(hiddens.reshape(M, Dh), Dh_p)
    t2 = _pad_lanes(tasks.reshape(M, Dt).astype(io_dtype), Dt_p)
    wdh = _pad2d(w_down[:Dh].astype(io_dtype), Dh_p, H_p)     # hiddens part of W_down
    wdt = _pad2d(w_down[Dh:].astype(io_dtype), Dt_p, H_p)     # tasks part of W_down
    wu = _pad2d(w_up.astype(io_dtype), H_p, Dh_p)
    bd = _pad2d(b_down.reshape(1, H).astype(jnp.float32), 1, H_p)
    bu = _pad2d(b_up.reshape(1, Dh).astype(jnp.float32), 1, Dh_p)

    # ---- VMEM budget: double-buffered row tiles + single-buffered resident
    #      weights/biases + f32/bf16 intermediates (incl. the bf16 copy of the
    #      GELU output) + Mosaic scratch margin.  Cap at ~85% of physical VMEM
    #      (<= 100 MiB) so v7x keeps headroom and v5e/v6e can use big tiles.
    tile_bytes = tm * (Dh_p + Dt_p + Dh_p) * itemsize          # h, t, out tiles
    weight_bytes = (Dh_p * H_p + Dt_p * H_p + H_p * Dh_p) * itemsize \
        + (H_p + Dh_p) * 4                                     # single-buffered
    interm_bytes = tm * H_p * (4 + itemsize) + tm * Dh_p * 8   # z/g, g_bf16, h_f32, up
    vmem_cap = min(int(phys_vmem * 0.85), 100 << 20)
    vmem_limit = int(min(max(2 * tile_bytes + weight_bytes + interm_bytes + (8 << 20),
                             32 << 20),
                         vmem_cap))

    const = pl.Buffered(1)   # constant-index blocks: one buffer, DMA'd once

    out = pl.pallas_call(
        adapter_kernel,
        out_shape=jax.ShapeDtypeStruct((M, Dh_p), io_dtype),
        grid_spec=pltpu.PrefetchScalarGridSpec(
            num_scalar_prefetch=0,
            grid=grid,
            in_specs=[
                pl.BlockSpec((tm, Dh_p), lambda i: (i, 0)),                         # hiddens rows
                pl.BlockSpec((tm, Dt_p), lambda i: (i, 0)),                         # tasks rows
                pl.BlockSpec((Dh_p, H_p), lambda i: (0, 0), pipeline_mode=const),   # W_down (hiddens)
                pl.BlockSpec((Dt_p, H_p), lambda i: (0, 0), pipeline_mode=const),   # W_down (tasks)
                pl.BlockSpec((1, H_p), lambda i: (0, 0), pipeline_mode=const),      # b_down (f32)
                pl.BlockSpec((H_p, Dh_p), lambda i: (0, 0), pipeline_mode=const),   # W_up
                pl.BlockSpec((1, Dh_p), lambda i: (0, 0), pipeline_mode=const),     # b_up (f32)
            ],
            out_specs=pl.BlockSpec((tm, Dh_p), lambda i: (i, 0)),
        ),
        compiler_params=pltpu.CompilerParams(
            dimension_semantics=("parallel",),
            vmem_limit_bytes=vmem_limit,
        ),
    )(h2, t2, wdh, wdt, bd, wu, bu)

    # NOTE: input_output_aliases (reuse the hiddens buffer for the output) is
    # intentionally not set: without caller-side donation XLA would insert a
    # defensive copy, costing HBM bandwidth instead of saving an allocation.
    if Dh_p != Dh:
        out = out[:, :Dh]          # only pay the lane slice when Dh isn't aligned
    return out.reshape(B, S, Dh)


def init_params(key, input_size, hidden_size, output_size):
    """Deterministic synthetic init matching nn.Linear shapes.

    Weights are stored transposed ((in, out)) for right-multiplication.
    """
    k1, k2, k3, k4 = jax.random.split(key, 4)
    w_down = jax.random.normal(k1, (input_size, hidden_size), jnp.float32) * 0.05
    b_down = jax.random.normal(k2, (hidden_size,), jnp.float32) * 0.05
    w_up = jax.random.normal(k3, (hidden_size, output_size), jnp.float32) * 0.05
    b_up = jax.random.normal(k4, (output_size,), jnp.float32) * 0.05
    return (w_down, b_down, w_up, b_up)


def adapter_reference(hiddens, tasks, params):
    w_down, b_down, w_up, b_up = params
    x = jnp.concatenate([hiddens, tasks], axis=-1)
    g = _gelu_exact(x @ w_down + b_down)
    return hiddens + (g @ w_up + b_up)


if __name__ == "__main__":
    key = jax.random.PRNGKey(0)
    k_h, k_t, k_p = jax.random.split(key, 3)

    B, S = 2, 8          # batch, sequence
    Dh = 32              # hiddens feature dim (== output_size for residual)
    Dt = 16              # tasks feature dim
    H = 64               # adapter bottleneck (hidden_size)

    hiddens = jax.random.normal(k_h, (B, S, Dh), jnp.float32)
    tasks = jax.random.normal(k_t, (B, S, Dt), jnp.float32)
    params = init_params(k_p, Dh + Dt, H, Dh)

    ref = adapter_reference(hiddens, tasks, params)

    # f32 HBM I/O (exact-numerics check vs the reference).
    out = jax.block_until_ready(adapter_forward(hiddens, tasks, params))
    assert out.shape == (B, S, Dh)
    assert jnp.allclose(out, ref, atol=2e-4, rtol=2e-4), "f32 mismatch vs reference"

    # bf16 HBM I/O (recommended deployment dtype: this op is HBM-bound,
    # bf16 halves the bytes moved; weights are cast to bf16 in the wrapper).
    out_bf16 = jax.block_until_ready(
        adapter_forward(hiddens.astype(jnp.bfloat16),
                        tasks.astype(jnp.bfloat16), params))
    assert out_bf16.dtype == jnp.bfloat16
    assert jnp.allclose(out_bf16.astype(jnp.float32), ref, atol=5e-2, rtol=5e-2), \
        "bf16 mismatch vs reference"

    print("KERNEL_OK")
</pallas_src>

<mosaic_0001>
module attributes {stable_mosaic.version = 11 : i64} {
  func.func @adapter_kernel(%arg0: i32, %arg1: memref<16x128xf32, #tpu.memory_space<vmem>>, %arg2: memref<16x128xf32, #tpu.memory_space<vmem>>, %arg3: memref<128x128xf32, #tpu.memory_space<vmem>>, %arg4: memref<128x128xf32, #tpu.memory_space<vmem>>, %arg5: memref<1x128xf32, #tpu.memory_space<vmem>>, %arg6: memref<128x128xf32, #tpu.memory_space<vmem>>, %arg7: memref<1x128xf32, #tpu.memory_space<vmem>>, %arg8: memref<16x128xf32, #tpu.memory_space<vmem>>) attributes {dimension_semantics = [#tpu.dimension_semantics<parallel>], iteration_bounds = array<i64: 1>, scalar_prefetch = 0 : i64, scratch_operands = 0 : i64, tpu.core_type = #tpu.core_type<tc>, window_params = [{transform_indices = @transform_0, window_bounds = array<i64: 16, 128>}, {transform_indices = @transform_1, window_bounds = array<i64: 16, 128>}, {pipeline_mode = #tpu.pipeline_mode<synchronous>, transform_indices = @transform_2, window_bounds = array<i64: 128, 128>}, {pipeline_mode = #tpu.pipeline_mode<synchronous>, transform_indices = @transform_3, window_bounds = array<i64: 128, 128>}, {pipeline_mode = #tpu.pipeline_mode<synchronous>, transform_indices = @transform_4, window_bounds = array<i64: 1, 128>}, {pipeline_mode = #tpu.pipeline_mode<synchronous>, transform_indices = @transform_5, window_bounds = array<i64: 128, 128>}, {pipeline_mode = #tpu.pipeline_mode<synchronous>, transform_indices = @transform_6, window_bounds = array<i64: 1, 128>}, {transform_indices = @transform_7, window_bounds = array<i64: 16, 128>}]} {
    %c0 = arith.constant 0 : index
    %c0_0 = arith.constant 0 : index
    %0 = vector.load %arg1[%c0, %c0_0] : memref<16x128xf32, #tpu.memory_space<vmem>>, vector<16x128xf32>
    %c0_1 = arith.constant 0 : index
    %c0_2 = arith.constant 0 : index
    %1 = vector.load %arg2[%c0_1, %c0_2] : memref<16x128xf32, #tpu.memory_space<vmem>>, vector<16x128xf32>
    %c0_3 = arith.constant 0 : index
    %c0_4 = arith.constant 0 : index
    %2 = vector.load %arg3[%c0_3, %c0_4] : memref<128x128xf32, #tpu.memory_space<vmem>>, vector<128x128xf32>
    %cst = arith.constant dense<0.000000e+00> : vector<16x128xf32>
    %3 = tpu.matmul %0, %2, %cst {dimension_numbers = #tpu.dot_dimension_numbers<[1], [0], [0], [1], [0, 0, 1, 1], [], []>} : vector<16x128xf32>, vector<128x128xf32>, vector<16x128xf32> -> vector<16x128xf32>
    %c0_5 = arith.constant 0 : index
    %c0_6 = arith.constant 0 : index
    %4 = vector.load %arg4[%c0_5, %c0_6] : memref<128x128xf32, #tpu.memory_space<vmem>>, vector<128x128xf32>
    %cst_7 = arith.constant dense<0.000000e+00> : vector<16x128xf32>
    %5 = tpu.matmul %1, %4, %cst_7 {dimension_numbers = #tpu.dot_dimension_numbers<[1], [0], [0], [1], [0, 0, 1, 1], [], []>} : vector<16x128xf32>, vector<128x128xf32>, vector<16x128xf32> -> vector<16x128xf32>
    %6 = arith.addf %3, %5 : vector<16x128xf32>
    %c0_8 = arith.constant 0 : index
    %c0_9 = arith.constant 0 : index
    %7 = vector.load %arg5[%c0_8, %c0_9] : memref<1x128xf32, #tpu.memory_space<vmem>>, vector<1x128xf32>
    %8 = vector.broadcast %7 : vector<1x128xf32> to vector<16x128xf32>
    %9 = arith.addf %6, %8 : vector<16x128xf32>
    %cst_10 = arith.constant 5.000000e-01 : f32
    %10 = vector.broadcast %cst_10 : f32 to vector<16x128xf32>
    %11 = arith.mulf %10, %9 : vector<16x128xf32>
    %cst_11 = arith.constant 0.707106769 : f32
    %12 = vector.broadcast %cst_11 : f32 to vector<16x128xf32>
    %13 = arith.mulf %9, %12 : vector<16x128xf32>
    %14 = math.erf %13 : vector<16x128xf32>
    %cst_12 = arith.constant 1.000000e+00 : f32
    %15 = vector.broadcast %cst_12 : f32 to vector<16x128xf32>
    %16 = arith.addf %15, %14 : vector<16x128xf32>
    %17 = arith.mulf %11, %16 : vector<16x128xf32>
    %c0_13 = arith.constant 0 : index
    %c0_14 = arith.constant 0 : index
    %18 = vector.load %arg6[%c0_13, %c0_14] : memref<128x128xf32, #tpu.memory_space<vmem>>, vector<128x128xf32>
    %cst_15 = arith.constant dense<0.000000e+00> : vector<16x128xf32>
    %19 = tpu.matmul %17, %18, %cst_15 {dimension_numbers = #tpu.dot_dimension_numbers<[1], [0], [0], [1], [0, 0, 1, 1], [], []>} : vector<16x128xf32>, vector<128x128xf32>, vector<16x128xf32> -> vector<16x128xf32>
    %c0_16 = arith.constant 0 : index
    %c0_17 = arith.constant 0 : index
    %20 = vector.load %arg7[%c0_16, %c0_17] : memref<1x128xf32, #tpu.memory_space<vmem>>, vector<1x128xf32>
    %21 = vector.broadcast %20 : vector<1x128xf32> to vector<16x128xf32>
    %22 = arith.addf %19, %21 : vector<16x128xf32>
    %23 = arith.addf %0, %22 : vector<16x128xf32>
    %c0_18 = arith.constant 0 : index
    %c0_19 = arith.constant 0 : index
    %24 = vector.load %arg8[%c0_18, %c0_19] : memref<16x128xf32, #tpu.memory_space<vmem>>, vector<16x128xf32>
    tpu.vector_store %arg8[%c0_18, %c0_19], %23 {strides = array<i32>} : memref<16x128xf32, #tpu.memory_space<vmem>>, vector<16x128xf32>,
    return
  }
  func.func @transform_0(%arg0: i32) -> (i32, i32) {
    %c0_i32 = arith.constant 0 : i32
    %c0_i32_0 = arith.constant 0 : i32
    return %arg0, %c0_i32 : i32, i32
  }
  func.func @transform_1(%arg0: i32) -> (i32, i32) {
    %c0_i32 = arith.constant 0 : i32
    %c0_i32_0 = arith.constant 0 : i32
    return %arg0, %c0_i32 : i32, i32
  }
  func.func @transform_2(%arg0: i32) -> (i32, i32) {
    %c0_i32 = arith.constant 0 : i32
    %c0_i32_0 = arith.constant 0 : i32
    %c0_i32_1 = arith.constant 0 : i32
    return %c0_i32, %c0_i32_0 : i32, i32
  }
  func.func @transform_3(%arg0: i32) -> (i32, i32) {
    %c0_i32 = arith.constant 0 : i32
    %c0_i32_0 = arith.constant 0 : i32
    %c0_i32_1 = arith.constant 0 : i32
    return %c0_i32, %c0_i32_0 : i32, i32
  }
  func.func @transform_4(%arg0: i32) -> (i32, i32) {
    %c0_i32 = arith.constant 0 : i32
    %c0_i32_0 = arith.constant 0 : i32
    %c0_i32_1 = arith.constant 0 : i32
    return %c0_i32, %c0_i32_0 : i32, i32
  }
  func.func @transform_5(%arg0: i32) -> (i32, i32) {
    %c0_i32 = arith.constant 0 : i32
    %c0_i32_0 = arith.constant 0 : i32
    %c0_i32_1 = arith.constant 0 : i32
    return %c0_i32, %c0_i32_0 : i32, i32
  }
  func.func @transform_6(%arg0: i32) -> (i32, i32) {
    %c0_i32 = arith.constant 0 : i32
    %c0_i32_0 = arith.constant 0 : i32
    %c0_i32_1 = arith.constant 0 : i32
    return %c0_i32, %c0_i32_0 : i32, i32
  }
  func.func @transform_7(%arg0: i32) -> (i32, i32) {
    %c0_i32 = arith.constant 0 : i32
    %c0_i32_0 = arith.constant 0 : i32
    return %arg0, %c0_i32 : i32, i32
  }
}

</mosaic_0001>

<llo_original>
// kernel: adapter_forward.1
$region0: #{adapter_forward.1}
  #allocation0 [shape = 'u32[]', space=smem, size = 0x4, offset = 0x4, fixed_abs, tag = 'smem constant byte address 0x4 - core index']
  #allocation1 [shape = 'u32[144,128]{1,0:T(1,128)}', space=vmem, size = 0x12000, scoped, tag = 'internal scratch']
  %s0 = inlined_call_operand.vmem [shape: f32[16,128], index: 0, kind: input, shape index: {}]
  %s1 = inlined_call_operand.vmem [shape: f32[16,128], index: 1, kind: input, shape index: {}]
  %s2 = inlined_call_operand.vmem [shape: f32[128,128], index: 2, kind: input, shape index: {}]
  %s3 = inlined_call_operand.vmem [shape: f32[128,128], index: 3, kind: input, shape index: {}]
  %s4 = inlined_call_operand.vmem [shape: f32[1,128], index: 4, kind: input, shape index: {}]
  %s5 = inlined_call_operand.vmem [shape: f32[128,128], index: 5, kind: input, shape index: {}]
  %s6 = inlined_call_operand.vmem [shape: f32[1,128], index: 6, kind: input, shape index: {}]
  %s7 = inlined_call_operand.vmem [shape: f32[16,128], index: 7, kind: output, shape index: {}]
  %s8 = sld [smem:[#allocation0]]
  $region38: #{adapter_forward.1} parent=0
    _
  %s10 = ssub.s32 1, %s8
  %s11 = scalar_select 0, %s10, %s8
  // Predicated region
  $region2: #{adapter_forward.1} parent=0 // pred_check
    _
  $region3: #{adapter_forward.1} parent=0 // pred_check_branch
    %13 = sbr.rel (0) target = $region5
  $region4: #{adapter_forward.1} parent=0 // pred_region
    _
  $region5: #{adapter_forward.1} parent=0 // pred_fallthru
    _
  // Predicated region
  $region6: #{adapter_forward.1} parent=0 // pred_check
    _
  $region7: #{adapter_forward.1} parent=0 // pred_check_branch
    %15 = sbr.rel (0) target = $region9
  $region8: #{adapter_forward.1} parent=0 // pred_region
    _
  $region9: #{adapter_forward.1} parent=0 // pred_fallthru
    _
  // Predicated region
  $region10: #{adapter_forward.1} parent=0 // pred_check
    _
  $region11: #{adapter_forward.1} parent=0 // pred_check_branch
    %17 = sbr.rel (0) target = $region13
  $region12: #{adapter_forward.1} parent=0 // pred_region
    _
  $region13: #{adapter_forward.1} parent=0 // pred_fallthru
    _
  // Predicated region
  $region14: #{adapter_forward.1} parent=0 // pred_check
    _
  $region15: #{adapter_forward.1} parent=0 // pred_check_branch
    %19 = sbr.rel (0) target = $region17
  $region16: #{adapter_forward.1} parent=0 // pred_region
    _
  $region17: #{adapter_forward.1} parent=0 // pred_fallthru
    _
  // Predicated region
  $region18: #{adapter_forward.1} parent=0 // pred_check
    _
  $region19: #{adapter_forward.1} parent=0 // pred_check_branch
    %21 = sbr.rel (0) target = $region21
  $region20: #{adapter_forward.1} parent=0 // pred_region
    _
  $region21: #{adapter_forward.1} parent=0 // pred_fallthru
    _
  // Predicated region
  $region22: #{adapter_forward.1} parent=0 // pred_check
    _
  $region23: #{adapter_forward.1} parent=0 // pred_check_branch
    %23 = sbr.rel (0) target = $region25
  $region24: #{adapter_forward.1} parent=0 // pred_region
    _
  $region25: #{adapter_forward.1} parent=0 // pred_fallthru
    _
  // Predicated region
  $region26: #{adapter_forward.1} parent=0 // pred_check
    _
  $region27: #{adapter_forward.1} parent=0 // pred_check_branch
    %25 = sbr.rel (0) target = $region29
  $region28: #{adapter_forward.1} parent=0 // pred_region
    _
  $region29: #{adapter_forward.1} parent=0 // pred_fallthru
    _
  %v26 = vld [vmem:[%s0] sm:$0xff]
  %v27 = vld [vmem:[%s0 + $0x8] sm:$0xff]
  %v28 = vld [vmem:[%s1] sm:$0xff]
  %v29 = vld [vmem:[%s1 + $0x8] sm:$0xff]
  %v30 = vld [vmem:[%s2] sm:$0xff]
  %v31 = vld [vmem:[%s2 + $0x8] sm:$0xff]
  %v32 = vld [vmem:[%s2 + $0x10] sm:$0xff]
  %v33 = vld [vmem:[%s2 + $0x18] sm:$0xff]
  %v34 = vld [vmem:[%s2 + $0x20] sm:$0xff]
  %v35 = vld [vmem:[%s2 + $0x28] sm:$0xff]
  %v36 = vld [vmem:[%s2 + $0x30] sm:$0xff]
  %v37 = vld [vmem:[%s2 + $0x38] sm:$0xff]
  %v38 = vld [vmem:[%s2 + $0x40] sm:$0xff]
  %v39 = vld [vmem:[%s2 + $0x48] sm:$0xff]
  %v40 = vld [vmem:[%s2 + $0x50] sm:$0xff]
  %v41 = vld [vmem:[%s2 + $0x58] sm:$0xff]
  %v42 = vld [vmem:[%s2 + $0x60] sm:$0xff]
  %v43 = vld [vmem:[%s2 + $0x68] sm:$0xff]
  %v44 = vld [vmem:[%s2 + $0x70] sm:$0xff]
  %v45 = vld [vmem:[%s2 + $0x78] sm:$0xff]
  %v46 = vld [vmem:[%s3] sm:$0xff]
  %v47 = vld [vmem:[%s3 + $0x8] sm:$0xff]
  %v48 = vld [vmem:[%s3 + $0x10] sm:$0xff]
  %v49 = vld [vmem:[%s3 + $0x18] sm:$0xff]
  %v50 = vld [vmem:[%s3 + $0x20] sm:$0xff]
  %v51 = vld [vmem:[%s3 + $0x28] sm:$0xff]
  %v52 = vld [vmem:[%s3 + $0x30] sm:$0xff]
  %v53 = vld [vmem:[%s3 + $0x38] sm:$0xff]
  %v54 = vld [vmem:[%s3 + $0x40] sm:$0xff]
  %v55 = vld [vmem:[%s3 + $0x48] sm:$0xff]
  %v56 = vld [vmem:[%s3 + $0x50] sm:$0xff]
  %v57 = vld [vmem:[%s3 + $0x58] sm:$0xff]
  %v58 = vld [vmem:[%s3 + $0x60] sm:$0xff]
  %v59 = vld [vmem:[%s3 + $0x68] sm:$0xff]
  %v60 = vld [vmem:[%s3 + $0x70] sm:$0xff]
  %v61 = vld [vmem:[%s3 + $0x78] sm:$0xff]
  %62 = vmatprep.subr.mxu0 0.0
  %63 = vmatpush1.msra.mxu0 %v61
  %64 = vmatprep.subr.mxu0 0.0
  %65 = vmatpush1.msra.mxu0 %v60
  %66 = vmatprep.subr.mxu0 0.0
  %67 = vmatpush1.msra.mxu0 %v59
  %68 = vmatprep.subr.mxu0 0.0
  %69 = vmatpush1.msra.mxu0 %v58
  %70 = vmatprep.subr.mxu0 0.0
  %71 = vmatpush1.msra.mxu0 %v57
  %72 = vmatprep.subr.mxu0 0.0
  %73 = vmatpush1.msra.mxu0 %v56
  %74 = vmatprep.subr.mxu0 0.0
  %75 = vmatpush1.msra.mxu0 %v55
  %76 = vmatprep.subr.mxu0 0.0
  %77 = vmatpush1.msra.mxu0 %v54
  %78 = vmatprep.subr.mxu0 0.0
  %79 = vmatpush1.msra.mxu0 %v53
  %80 = vmatprep.subr.mxu0 0.0
  %81 = vmatpush1.msra.mxu0 %v52
  %82 = vmatprep.subr.mxu0 0.0
  %83 = vmatpush1.msra.mxu0 %v51
  %84 = vmatprep.subr.mxu0 0.0
  %85 = vmatpush1.msra.mxu0 %v50
  %86 = vmatprep.subr.mxu0 0.0
  %87 = vmatpush1.msra.mxu0 %v49
  %88 = vmatprep.subr.mxu0 0.0
  %89 = vmatpush1.msra.mxu0 %v48
  %90 = vmatprep.subr.mxu0 0.0
  %91 = vmatpush1.msra.mxu0 %v47
  %92 = vmatprep.subr.mxu0 0.0
  %93 = vmatpush1.msra.mxu0 %v46
  %94 = vmatprep.subr.mxu0 0.0
  %95 = vmatpush2.msra.mxu0 0.0
  %96 = vmatprep.subr.mxu0 0.0
  %97 = vmatpush2.msra.mxu0 0.0
  %98 = vmatprep.subr.mxu0 0.0
  %99 = vmatpush2.msra.mxu0 0.0
  %100 = vmatprep.subr.mxu0 0.0
  %101 = vmatpush2.msra.mxu0 0.0
  %102 = vmatprep.subr.mxu0 0.0
  %103 = vmatpush2.msra.mxu0 0.0
  %104 = vmatprep.subr.mxu0 0.0
  %105 = vmatpush2.msra.mxu0 0.0
  %106 = vmatprep.subr.mxu0 0.0
  %107 = vmatpush2.msra.mxu0 0.0
  %108 = vmatprep.subr.mxu0 0.0
  %109 = vmatpush2.msra.mxu0 0.0
  %110 = vmatprep.subr.mxu0 0.0
  %111 = vmatpush2.msra.mxu0 0.0
  %112 = vmatprep.subr.mxu0 0.0
  %113 = vmatpush2.msra.mxu0 0.0
  %114 = vmatprep.subr.mxu0 0.0
  %115 = vmatpush2.msra.mxu0 0.0
  %116 = vmatprep.subr.mxu0 0.0
  %117 = vmatpush2.msra.mxu0 0.0
  %118 = vmatprep.subr.mxu0 0.0
  %119 = vmatpush2.msra.mxu0 0.0
  %120 = vmatprep.subr.mxu0 0.0
  %121 = vmatpush2.msra.mxu0 0.0
  %122 = vmatprep.subr.mxu0 0.0
  %123 = vmatpush2.msra.mxu0 0.0
  %124 = vmatprep.subr.mxu0 0.0
  %125 = vmatpush2.msra.mxu0 0.0
  %126 = vmatprep.mubr.f32.mxu0 0.0
  %127 = vmatmul.mubr.f32.gmra.mxu0 %v28
  %v128 = vpop.f32.mrf.mxu0
  %v129 = vadd.f32 0.0, %v128
  %v130 = vpop.f32.mrf.mxu0
  %131 = vmatprep.mubr.f32.mxu0 0.0
  %132 = vmatmul.mubr.f32.gmra.mxu0 %v29
  %v133 = vpop.f32.mrf.mxu0
  %v134 = vadd.f32 0.0, %v133
  %v135 = vpop.f32.mrf.mxu0
  %136 = vdwg.mxu0
  %137 = vmatprep.subr.mxu0 0.0
  %138 = vmatpush1.msra.mxu0 %v45
  %139 = vmatprep.subr.mxu0 0.0
  %140 = vmatpush1.msra.mxu0 %v44
  %141 = vmatprep.subr.mxu0 0.0
  %142 = vmatpush1.msra.mxu0 %v43
  %143 = vmatprep.subr.mxu0 0.0
  %144 = vmatpush1.msra.mxu0 %v42
  %145 = vmatprep.subr.mxu0 0.0
  %146 = vmatpush1.msra.mxu0 %v41
  %147 = vmatprep.subr.mxu0 0.0
  %148 = vmatpush1.msra.mxu0 %v40
  %149 = vmatprep.subr.mxu0 0.0
  %150 = vmatpush1.msra.mxu0 %v39
  %151 = vmatprep.subr.mxu0 0.0
  %152 = vmatpush1.msra.mxu0 %v38
  %153 = vmatprep.subr.mxu0 0.0
  %154 = vmatpush1.msra.mxu0 %v37
  %155 = vmatprep.subr.mxu0 0.0
  %156 = vmatpush1.msra.mxu0 %v36
  %157 = vmatprep.subr.mxu0 0.0
  %158 = vmatpush1.msra.mxu0 %v35
  %159 = vmatprep.subr.mxu0 0.0
  %160 = vmatpush1.msra.mxu0 %v34
  %161 = vmatprep.subr.mxu0 0.0
  %162 = vmatpush1.msra.mxu0 %v33
  %163 = vmatprep.subr.mxu0 0.0
  %164 = vmatpush1.msra.mxu0 %v32
  %165 = vmatprep.subr.mxu0 0.0
  %166 = vmatpush1.msra.mxu0 %v31
  %167 = vmatprep.subr.mxu0 0.0
  %168 = vmatpush1.msra.mxu0 %v30
  %169 = vmatprep.subr.mxu0 0.0
  %170 = vmatpush2.msra.mxu0 0.0
  %171 = vmatprep.subr.mxu0 0.0
  %172 = vmatpush2.msra.mxu0 0.0
  %173 = vmatprep.subr.mxu0 0.0
  %174 = vmatpush2.msra.mxu0 0.0
  %175 = vmatprep.subr.mxu0 0.0
  %176 = vmatpush2.msra.mxu0 0.0
  %177 = vmatprep.subr.mxu0 0.0
  %178 = vmatpush2.msra.mxu0 0.0
  %179 = vmatprep.subr.mxu0 0.0
  %180 = vmatpush2.msra.mxu0 0.0
  %181 = vmatprep.subr.mxu0 0.0
  %182 = vmatpush2.msra.mxu0 0.0
  %183 = vmatprep.subr.mxu0 0.0
  %184 = vmatpush2.msra.mxu0 0.0
  %185 = vmatprep.subr.mxu0 0.0
  %186 = vmatpush2.msra.mxu0 0.0
  %187 = vmatprep.subr.mxu0 0.0
  %188 = vmatpush2.msra.mxu0 0.0
  %189 = vmatprep.subr.mxu0 0.0
  %190 = vmatpush2.msra.mxu0 0.0
  %191 = vmatprep.subr.mxu0 0.0
  %192 = vmatpush2.msra.mxu0 0.0
  %193 = vmatprep.subr.mxu0 0.0
  %194 = vmatpush2.msra.mxu0 0.0
  %195 = vmatprep.subr.mxu0 0.0
  %196 = vmatpush2.msra.mxu0 0.0
  %197 = vmatprep.subr.mxu0 0.0
  %198 = vmatpush2.msra.mxu0 0.0
  %199 = vmatprep.subr.mxu0 0.0
  %200 = vmatpush2.msra.mxu0 0.0
  %201 = vmatprep.mubr.f32.mxu0 0.0
  %202 = vmatmul.mubr.f32.gmra.mxu0 %v26
  %v203 = vpop.f32.mrf.mxu0
  %v204 = vadd.f32 %v129, %v203
  %v205 = vpop.f32.mrf.mxu0
  %206 = vmatprep.mubr.f32.mxu0 0.0
  %207 = vmatmul.mubr.f32.gmra.mxu0 %v27
  %v208 = vpop.f32.mrf.mxu0
  %v209 = vadd.f32 %v134, %v208
  %v210 = vpop.f32.mrf.mxu0
  %211 = vdwg.mxu0
  %v212 = vld [vmem:[%s4] sm:$0x1]
  %v214 = vlaneseq
  %v215 = vshrl.u32 %v214, 7
  %v216 = vsub.s32 0, %v215
  %v217 = vrot.slane %v212, %v216
  %v219 = vadd.f32 %v204, %v217
  %v220 = vadd.f32 %v209, %v217
  %v221 = vmul.f32 %v219, 0.5
  %v222 = vmul.f32 %v220, 0.5
  %v223 = vmul.f32 %v219, 0.70710677
  %v224 = vmul.f32 %v220, 0.70710677
  %v225 = verf.f32.pop %v223
  %v226 = verf.f32.pop %v224
  %v227 = vadd.f32 %v225, 1.0
  %v228 = vadd.f32 %v226, 1.0
  %v229 = vmul.f32 %v221, %v227
  %v230 = vmul.f32 %v222, %v228
  %v231 = vld [vmem:[%s5] sm:$0xff]
  %v232 = vld [vmem:[%s5 + $0x8] sm:$0xff]
  %v233 = vld [vmem:[%s5 + $0x10] sm:$0xff]
  %v234 = vld [vmem:[%s5 + $0x18] sm:$0xff]
  %v235 = vld [vmem:[%s5 + $0x20] sm:$0xff]
  %v236 = vld [vmem:[%s5 + $0x28] sm:$0xff]
  %v237 = vld [vmem:[%s5 + $0x30] sm:$0xff]
  %v238 = vld [vmem:[%s5 + $0x38] sm:$0xff]
  %v239 = vld [vmem:[%s5 + $0x40] sm:$0xff]
  %v240 = vld [vmem:[%s5 + $0x48] sm:$0xff]
  %v241 = vld [vmem:[%s5 + $0x50] sm:$0xff]
  %v242 = vld [vmem:[%s5 + $0x58] sm:$0xff]
  %v243 = vld [vmem:[%s5 + $0x60] sm:$0xff]
  %v244 = vld [vmem:[%s5 + $0x68] sm:$0xff]
  %v245 = vld [vmem:[%s5 + $0x70] sm:$0xff]
  %v246 = vld [vmem:[%s5 + $0x78] sm:$0xff]
  %v247 = vld [vmem:[%s6] sm:$0x1]
  %v249 = vlaneseq
  %v250 = vshrl.u32 %v249, 7
  %v251 = vsub.s32 0, %v250
  %v252 = vrot.slane %v247, %v251
  %254 = vmatprep.subr.mxu0 0.0
  %255 = vmatpush1.msra.mxu0 %v246
  %256 = vmatprep.subr.mxu0 0.0
  %257 = vmatpush1.msra.mxu0 %v245
  %258 = vmatprep.subr.mxu0 0.0
  %259 = vmatpush1.msra.mxu0 %v244
  %260 = vmatprep.subr.mxu0 0.0
  %261 = vmatpush1.msra.mxu0 %v243
  %262 = vmatprep.subr.mxu0 0.0
  %263 = vmatpush1.msra.mxu0 %v242
  %264 = vmatprep.subr.mxu0 0.0
  %265 = vmatpush1.msra.mxu0 %v241
  %266 = vmatprep.subr.mxu0 0.0
  %267 = vmatpush1.msra.mxu0 %v240
  %268 = vmatprep.subr.mxu0 0.0
  %269 = vmatpush1.msra.mxu0 %v239
  %270 = vmatprep.subr.mxu0 0.0
  %271 = vmatpush1.msra.mxu0 %v238
  %272 = vmatprep.subr.mxu0 0.0
  %273 = vmatpush1.msra.mxu0 %v237
  %274 = vmatprep.subr.mxu0 0.0
  %275 = vmatpush1.msra.mxu0 %v236
  %276 = vmatprep.subr.mxu0 0.0
  %277 = vmatpush1.msra.mxu0 %v235
  %278 = vmatprep.subr.mxu0 0.0
  %279 = vmatpush1.msra.mxu0 %v234
  %280 = vmatprep.subr.mxu0 0.0
  %281 = vmatpush1.msra.mxu0 %v233
  %282 = vmatprep.subr.mxu0 0.0
  %283 = vmatpush1.msra.mxu0 %v232
  %284 = vmatprep.subr.mxu0 0.0
  %285 = vmatpush1.msra.mxu0 %v231
  %286 = vmatprep.subr.mxu0 0.0
  %287 = vmatpush2.msra.mxu0 0.0
  %288 = vmatprep.subr.mxu0 0.0
  %289 = vmatpush2.msra.mxu0 0.0
  %290 = vmatprep.subr.mxu0 0.0
  %291 = vmatpush2.msra.mxu0 0.0
  %292 = vmatprep.subr.mxu0 0.0
  %293 = vmatpush2.msra.mxu0 0.0
  %294 = vmatprep.subr.mxu0 0.0
  %295 = vmatpush2.msra.mxu0 0.0
  %296 = vmatprep.subr.mxu0 0.0
  %297 = vmatpush2.msra.mxu0 0.0
  %298 = vmatprep.subr.mxu0 0.0
  %299 = vmatpush2.msra.mxu0 0.0
  %300 = vmatprep.subr.mxu0 0.0
  %301 = vmatpush2.msra.mxu0 0.0
  %302 = vmatprep.subr.mxu0 0.0
  %303 = vmatpush2.msra.mxu0 0.0
  %304 = vmatprep.subr.mxu0 0.0
  %305 = vmatpush2.msra.mxu0 0.0
  %306 = vmatprep.subr.mxu0 0.0
  %307 = vmatpush2.msra.mxu0 0.0
  %308 = vmatprep.subr.mxu0 0.0
  %309 = vmatpush2.msra.mxu0 0.0
  %310 = vmatprep.subr.mxu0 0.0
  %311 = vmatpush2.msra.mxu0 0.0
  %312 = vmatprep.subr.mxu0 0.0
  %313 = vmatpush2.msra.mxu0 0.0
  %314 = vmatprep.subr.mxu0 0.0
  %315 = vmatpush2.msra.mxu0 0.0
  %316 = vmatprep.subr.mxu0 0.0
  %317 = vmatpush2.msra.mxu0 0.0
  %318 = vmatprep.mubr.f32.mxu0 0.0
  %319 = vmatmul.mubr.f32.gmra.mxu0 %v229
  %v320 = vpop.f32.mrf.mxu0
  %v321 = vadd.f32 %v252, %v320
  %v322 = vpop.f32.mrf.mxu0
  %323 = vmatprep.mubr.f32.mxu0 0.0
  %324 = vmatmul.mubr.f32.gmra.mxu0 %v230
  %v325 = vpop.f32.mrf.mxu0
  %v326 = vadd.f32 %v252, %v325
  %v327 = vpop.f32.mrf.mxu0
  %328 = vdwg.mxu0
  %v329 = vadd.f32 %v26, %v321
  %v330 = vadd.f32 %v27, %v326
  %331 = vst [vmem:[%s7] sm:$0xff] %v329
  %332 = vst [vmem:[%s7 + $0x8] sm:$0xff] %v330
  // Predicated region
  $region30: #{adapter_forward.1} parent=0 // pred_check
    _
  $region31: #{adapter_forward.1} parent=0 // pred_check_branch
    %334 = sbr.rel (0) target = $region33
  $region32: #{adapter_forward.1} parent=0 // pred_region
    _
  $region33: #{adapter_forward.1} parent=0 // pred_fallthru
    _
  // Predicated region
  $region34: #{adapter_forward.1} parent=0 // pred_check
    _
  $region35: #{adapter_forward.1} parent=0 // pred_check_branch
    %336 = sbr.rel (0) target = $region37
  $region36: #{adapter_forward.1} parent=0 // pred_region
    _
  $region37: #{adapter_forward.1} parent=0 // pred_fallthru
    _

</llo_original>
